<compile_context>
chip_gen: v7x
topology: tpu7x:2x2x1
jax: 0.10.0
libtpu: 0.0.40
codegen_flags: <defaults>
</compile_context>

<pallas_src>
import jax
import jax.numpy as jnp
import numpy as np
from jax import lax
from jax.experimental import pallas as pl
from jax.experimental.pallas import tpu as pltpu

# ----------------------------- configuration --------------------------------
B = 2              # batch
CIN = 3            # input channels
H = W = 16         # input spatial size
C1 = 32            # stage-1 channels
C2 = 64            # stage-2 channels
NBOX = 4           # box-regression channels -> "mul2_output"
NC = 12            # class channels          -> "sigmoid_output"
HEAD = NBOX + NC   # real head channels (16)
HEAD_PAD = 128     # head channels zero-padded to a full lane tile

H1 = W1 = H // 2   # 8   stage-1 output spatial
H2 = W2 = H // 4   # 4   stage-2 output spatial
M2 = H2 * W2       # 16  anchors per image (N of the (B, C, N) prediction map)
NPOS = B * M2      # 32  rows processed in the single grid step
K1 = 3 * 3 * CIN   # 27  stage-1 im2col depth
K1P = 32           # stage-1 im2col depth, padded per tap
KS1 = 9 * K1P      # 288 stage-1 fused reduction depth (tap-major)
KS2 = 9 * C1       # 288 stage-2 reduction depth (tap-major im2col of y1)
KP = 384           # both reduction depths zero-padded to 3 x 128 lanes


# ------------------------------- kernel --------------------------------------

def _silu(v):
    # Exact SiLU: v * sigmoid(v) == v / (1 + exp(-v)).  exp runs on the EUP;
    # the divide is exact (review correctness note about the approx reciprocal).
    return v / (1.0 + jnp.exp(-v))


def _fused_yolo_kernel(a_ref, w1_ref, b1_ref, w2_ref, b2_ref, wh_ref, bh_ref,
                       out_ref):
    """Whole forward for the whole batch in one step: 3 matmuls + epilogues."""
    f32 = jnp.float32

    # Stage 1 (evaluated directly in stage-2 im2col order via the block-diagonal
    # weight): one MXU matmul; its output IS the stage-2 patch matrix.
    p = _silu(jnp.dot(a_ref[...], w1_ref[...], preferred_element_type=f32)
              + b1_ref[...])                                   # (NPOS, KP) f32

    # Stage 2: ONE matmul over the full patch axis (MXU does the accumulation).
    y2 = _silu(jnp.dot(p.astype(jnp.bfloat16), w2_ref[...],
                       preferred_element_type=f32)
               + b2_ref[...])                                  # (NPOS, C2) f32

    # Detect head: 1x1 conv to 128 zero-padded channels -> lane-dense stores.
    out_ref[...] = (jnp.dot(y2.astype(jnp.bfloat16), wh_ref[...],
                            preferred_element_type=f32)
                    + bh_ref[...])                             # (NPOS, 128) f32


# ------------------------------- JAX glue -------------------------------------

def _stage2_tap_slices(arr_padded):
    """The 9 stage-2 tap windows (tap-major) of a zero-padded stage-1-res map."""
    return [arr_padded[:, i:i + 2 * H2:2, j:j + 2 * W2:2, :]
            for i in range(3) for j in range(3)]


def _build_kernel_operands(x_nhwc, params):
    f32, bf16 = jnp.float32, jnp.bfloat16

    # Stage-1 im2col at every stage-1 output position, per-tap depth -> K1P.
    xp = jnp.pad(x_nhwc, ((0, 0), (1, 1), (1, 1), (0, 0)))
    s1 = jnp.concatenate([xp[:, di:di + 2 * H1:2, dj:dj + 2 * W1:2, :]
                          for di in range(3) for dj in range(3)], axis=-1)
    s1 = jnp.pad(s1, ((0, 0), (0, 0), (0, 0), (0, K1P - K1)))      # (B,8,8,32)

    # Re-expand in stage-2 im2col order: zero-pad the 8x8 grid (this realizes
    # stage-2's conv padding), take the 9 stride-2 tap windows, concat tap-major.
    s1p = jnp.pad(s1, ((0, 0), (1, 1), (1, 1), (0, 0)))            # (B,10,10,32)
    a_big = jnp.concatenate(_stage2_tap_slices(s1p), axis=-1)      # (B,4,4,288)
    a_big = a_big.reshape(NPOS, KS1)
    a_big = jnp.pad(a_big, ((0, 0), (0, KP - KS1))).astype(bf16)   # (32, 384)

    # Validity of each (position, tap) cell (0 where it is stage-2 padding);
    # fold it into the broadcast stage-1 bias so padding cells stay exactly 0.
    ones = jnp.pad(jnp.ones((B, H1, W1, 1), f32), ((0, 0), (1, 1), (1, 1), (0, 0)))
    valid = jnp.concatenate(_stage2_tap_slices(ones), axis=-1).reshape(NPOS, 9)
    b1_big = (valid[:, :, None] * params["b1"].reshape(1, 1, C1)).reshape(NPOS, KS2)
    b1_big = jnp.pad(b1_big, ((0, 0), (0, KP - KS2)))              # (32, 384) f32

    # Weights: block-diagonal stage-1 weight (one W1 block per tap), stacked
    # stage-2 weight (tap-major rows), zero-padded head weight/bias.
    w1 = jnp.pad(params["w1_hwio"].reshape(K1, C1), ((0, K1P - K1), (0, 0)))
    w1_big = jnp.kron(jnp.eye(9, dtype=f32), w1)                   # (288, 288)
    w1_big = jnp.pad(w1_big, ((0, KP - KS1), (0, KP - KS2))).astype(bf16)
    w2 = params["w2_hwio"].reshape(KS2, C2)
    w2 = jnp.pad(w2, ((0, KP - KS2), (0, 0))).astype(bf16)         # (384, 64)
    wh = jnp.pad(params["wh"], ((0, 0), (0, HEAD_PAD - HEAD))).astype(bf16)
    bh = jnp.pad(params["bh"], ((0, 0), (0, HEAD_PAD - HEAD)))

    return a_big, w1_big, b1_big, w2, params["b2"], wh, bh


def init_params(key):
    ks = jax.random.split(key, 6)
    return {
        "w1_hwio": jax.random.normal(ks[0], (3, 3, CIN, C1), jnp.float32) * 0.10,
        "b1": jax.random.normal(ks[1], (1, C1), jnp.float32) * 0.10,
        "w2_hwio": jax.random.normal(ks[2], (3, 3, C1, C2), jnp.float32) * 0.05,
        "b2": jax.random.normal(ks[3], (1, C2), jnp.float32) * 0.05,
        "wh": jax.random.normal(ks[4], (C2, HEAD), jnp.float32) * 0.05,
        "bh": jax.random.normal(ks[5], (1, HEAD), jnp.float32) * 0.05,
    }


def yolov12_no_concat_forward(x_nchw, params):
    """Equivalent of YOLOv12NoConcat.forward with the synthetic yolomodel."""
    x = jnp.transpose(x_nchw, (0, 2, 3, 1)).astype(jnp.float32)    # NCHW -> NHWC
    a_big, w1_big, b1_big, w2, b2, wh, bh = _build_kernel_operands(x, params)

    out = pl.pallas_call(
        _fused_yolo_kernel,
        out_shape=jax.ShapeDtypeStruct((NPOS, HEAD_PAD), jnp.float32),
        grid=(1,),                                        # single step, whole batch
        in_specs=[
            pl.BlockSpec((NPOS, KP), lambda i: (0, 0)),         # a_big
            pl.BlockSpec((KP, KP), lambda i: (0, 0)),           # w1_big (block-diag)
            pl.BlockSpec((NPOS, KP), lambda i: (0, 0)),         # b1_big (pre-masked)
            pl.BlockSpec((KP, C2), lambda i: (0, 0)),           # w2
            pl.BlockSpec((1, C2), lambda i: (0, 0)),            # b2
            pl.BlockSpec((C2, HEAD_PAD), lambda i: (0, 0)),     # wh (zero-padded)
            pl.BlockSpec((1, HEAD_PAD), lambda i: (0, 0)),      # bh (zero-padded)
        ],
        out_specs=pl.BlockSpec((NPOS, HEAD_PAD), lambda i: (0, 0)),
        compiler_params=pltpu.CompilerParams(
            # One grid step: nothing to parallelize; "parallel" would not split
            # work across TensorCores anyway (review note).
            dimension_semantics=("arbitrary",),
            vmem_limit_bytes=16 * 1024 * 1024,            # ~1 MiB actually used
        ),
    )(a_big, w1_big, b1_big, w2, b2, wh, bh)

    # Cheap JAX glue: trim channel padding, go to (B, C, N), then split exactly
    # like the reference module (no extra multiply / sigmoid is applied).
    y = out.reshape(B, M2, HEAD_PAD)[:, :, :HEAD].transpose(0, 2, 1)  # (B, 16, N)
    mul2_output = y[:, :NBOX, :]
    sigmoid_output = y[:, NBOX:, :]
    return mul2_output, sigmoid_output


# ---------------------------- pure-JAX reference ------------------------------

def reference_forward(x_nchw, params):
    """Independent reference (lax.conv) with matching bf16 MXU inputs."""
    def conv_silu(z, w_hwio, b):
        z = lax.conv_general_dilated(
            z.astype(jnp.bfloat16), w_hwio.astype(jnp.bfloat16),
            window_strides=(2, 2), padding=((1, 1), (1, 1)),
            dimension_numbers=("NHWC", "HWIO", "NHWC"),
            preferred_element_type=jnp.float32)
        return jax.nn.silu(z + b.reshape(1, 1, 1, -1))

    x = jnp.transpose(x_nchw, (0, 2, 3, 1)).astype(jnp.float32)
    y1 = conv_silu(x, params["w1_hwio"], params["b1"])
    y2 = conv_silu(y1, params["w2_hwio"], params["b2"])
    yh = jnp.einsum("bhwc,cd->bhwd", y2.astype(jnp.bfloat16),
                    params["wh"].astype(jnp.bfloat16),
                    preferred_element_type=jnp.float32)
    yh = yh + params["bh"].reshape(1, 1, 1, -1)
    y = yh.reshape(B, M2, HEAD).transpose(0, 2, 1)                 # (B, C, N)
    return y[:, :NBOX, :], y[:, NBOX:, :]


# --------------------------------- main ----------------------------------------

if __name__ == "__main__":
    key = jax.random.PRNGKey(0)
    kx, kp = jax.random.split(key)
    x = jax.random.normal(kx, (B, CIN, H, W), jnp.float32)
    params = init_params(kp)

    fwd = jax.jit(yolov12_no_concat_forward)
    mul2_out, sig_out = fwd(x, params)
    jax.block_until_ready(mul2_out)
    jax.block_until_ready(sig_out)

    assert mul2_out.shape == (B, NBOX, M2)
    assert sig_out.shape == (B, NC, M2)

    ref_mul2, ref_sig = reference_forward(x, params)
    np.testing.assert_allclose(np.asarray(mul2_out), np.asarray(ref_mul2),
                               atol=2e-2, rtol=2e-2)
    np.testing.assert_allclose(np.asarray(sig_out), np.asarray(ref_sig),
                               atol=2e-2, rtol=2e-2)
    print("KERNEL_OK")
</pallas_src>

<mosaic_0001>
module attributes {stable_mosaic.version = 11 : i64} {
  func.func @_fused_yolo_kernel(%arg0: i32, %arg1: memref<32x384xbf16, #tpu.memory_space<vmem>>, %arg2: memref<384x384xbf16, #tpu.memory_space<vmem>>, %arg3: memref<32x384xf32, #tpu.memory_space<vmem>>, %arg4: memref<384x64xbf16, #tpu.memory_space<vmem>>, %arg5: memref<1x64xf32, #tpu.memory_space<vmem>>, %arg6: memref<64x128xbf16, #tpu.memory_space<vmem>>, %arg7: memref<1x128xf32, #tpu.memory_space<vmem>>, %arg8: memref<32x128xf32, #tpu.memory_space<vmem>>) attributes {dimension_semantics = [#tpu.dimension_semantics<arbitrary>], iteration_bounds = array<i64: 1>, scalar_prefetch = 0 : i64, scratch_operands = 0 : i64, tpu.core_type = #tpu.core_type<tc>, window_params = [{pipeline_mode = #tpu.pipeline_mode<synchronous>, transform_indices = @transform_0, window_bounds = array<i64: 32, 384>}, {pipeline_mode = #tpu.pipeline_mode<synchronous>, transform_indices = @transform_1, window_bounds = array<i64: 384, 384>}, {pipeline_mode = #tpu.pipeline_mode<synchronous>, transform_indices = @transform_2, window_bounds = array<i64: 32, 384>}, {pipeline_mode = #tpu.pipeline_mode<synchronous>, transform_indices = @transform_3, window_bounds = array<i64: 384, 64>}, {pipeline_mode = #tpu.pipeline_mode<synchronous>, transform_indices = @transform_4, window_bounds = array<i64: 1, 64>}, {pipeline_mode = #tpu.pipeline_mode<synchronous>, transform_indices = @transform_5, window_bounds = array<i64: 64, 128>}, {pipeline_mode = #tpu.pipeline_mode<synchronous>, transform_indices = @transform_6, window_bounds = array<i64: 1, 128>}, {pipeline_mode = #tpu.pipeline_mode<synchronous>, transform_indices = @transform_7, window_bounds = array<i64: 32, 128>}]} {
    %c0 = arith.constant 0 : index
    %c0_0 = arith.constant 0 : index
    %0 = vector.load %arg1[%c0, %c0_0] : memref<32x384xbf16, #tpu.memory_space<vmem>>, vector<32x384xbf16>
    %c0_1 = arith.constant 0 : index
    %c0_2 = arith.constant 0 : index
    %1 = vector.load %arg2[%c0_1, %c0_2] : memref<384x384xbf16, #tpu.memory_space<vmem>>, vector<384x384xbf16>
    %cst = arith.constant dense<0.000000e+00> : vector<32x384xf32>
    %2 = tpu.matmul %0, %1, %cst {dimension_numbers = #tpu.dot_dimension_numbers<[1], [0], [0], [1], [0, 0, 1, 1], [], []>} : vector<32x384xbf16>, vector<384x384xbf16>, vector<32x384xf32> -> vector<32x384xf32>
    %c0_3 = arith.constant 0 : index
    %c0_4 = arith.constant 0 : index
    %3 = vector.load %arg3[%c0_3, %c0_4] : memref<32x384xf32, #tpu.memory_space<vmem>>, vector<32x384xf32>
    %4 = arith.addf %2, %3 : vector<32x384xf32>
    %cst_5 = arith.constant 0.000000e+00 : f32
    %5 = vector.broadcast %cst_5 : f32 to vector<32x384xf32>
    %6 = arith.subf %5, %4 : vector<32x384xf32>
    %7 = math.exp %6 : vector<32x384xf32>
    %cst_6 = arith.constant 1.000000e+00 : f32
    %8 = vector.broadcast %cst_6 : f32 to vector<32x384xf32>
    %9 = arith.addf %8, %7 : vector<32x384xf32>
    %10 = arith.divf %4, %9 : vector<32x384xf32>
    %11 = arith.truncf %10 : vector<32x384xf32> to vector<32x384xbf16>
    %c0_7 = arith.constant 0 : index
    %c0_8 = arith.constant 0 : index
    %12 = vector.load %arg4[%c0_7, %c0_8] : memref<384x64xbf16, #tpu.memory_space<vmem>>, vector<384x64xbf16>
    %cst_9 = arith.constant dense<0.000000e+00> : vector<32x64xf32>
    %13 = tpu.matmul %11, %12, %cst_9 {dimension_numbers = #tpu.dot_dimension_numbers<[1], [0], [0], [1], [0, 0, 1, 1], [], []>} : vector<32x384xbf16>, vector<384x64xbf16>, vector<32x64xf32> -> vector<32x64xf32>
    %c0_10 = arith.constant 0 : index
    %c0_11 = arith.constant 0 : index
    %14 = vector.load %arg5[%c0_10, %c0_11] : memref<1x64xf32, #tpu.memory_space<vmem>>, vector<1x64xf32>
    %15 = vector.broadcast %14 : vector<1x64xf32> to vector<32x64xf32>
    %16 = arith.addf %13, %15 : vector<32x64xf32>
    %cst_12 = arith.constant 0.000000e+00 : f32
    %17 = vector.broadcast %cst_12 : f32 to vector<32x64xf32>
    %18 = arith.subf %17, %16 : vector<32x64xf32>
    %19 = math.exp %18 : vector<32x64xf32>
    %cst_13 = arith.constant 1.000000e+00 : f32
    %20 = vector.broadcast %cst_13 : f32 to vector<32x64xf32>
    %21 = arith.addf %20, %19 : vector<32x64xf32>
    %22 = arith.divf %16, %21 : vector<32x64xf32>
    %23 = arith.truncf %22 : vector<32x64xf32> to vector<32x64xbf16>
    %c0_14 = arith.constant 0 : index
    %c0_15 = arith.constant 0 : index
    %24 = vector.load %arg6[%c0_14, %c0_15] : memref<64x128xbf16, #tpu.memory_space<vmem>>, vector<64x128xbf16>
    %cst_16 = arith.constant dense<0.000000e+00> : vector<32x128xf32>
    %25 = tpu.matmul %23, %24, %cst_16 {dimension_numbers = #tpu.dot_dimension_numbers<[1], [0], [0], [1], [0, 0, 1, 1], [], []>} : vector<32x64xbf16>, vector<64x128xbf16>, vector<32x128xf32> -> vector<32x128xf32>
    %c0_17 = arith.constant 0 : index
    %c0_18 = arith.constant 0 : index
    %26 = vector.load %arg7[%c0_17, %c0_18] : memref<1x128xf32, #tpu.memory_space<vmem>>, vector<1x128xf32>
    %27 = vector.broadcast %26 : vector<1x128xf32> to vector<32x128xf32>
    %28 = arith.addf %25, %27 : vector<32x128xf32>
    %c0_19 = arith.constant 0 : index
    %c0_20 = arith.constant 0 : index
    %29 = vector.load %arg8[%c0_19, %c0_20] : memref<32x128xf32, #tpu.memory_space<vmem>>, vector<32x128xf32>
    tpu.vector_store %arg8[%c0_19, %c0_20], %28 {strides = array<i32>} : memref<32x128xf32, #tpu.memory_space<vmem>>, vector<32x128xf32>,
    return
  }
  func.func @transform_0(%arg0: i32) -> (i32, i32) {
    %c0_i32 = arith.constant 0 : i32
    %c0_i32_0 = arith.constant 0 : i32
    %c0_i32_1 = arith.constant 0 : i32
    return %c0_i32, %c0_i32_0 : i32, i32
  }
  func.func @transform_1(%arg0: i32) -> (i32, i32) {
    %c0_i32 = arith.constant 0 : i32
    %c0_i32_0 = arith.constant 0 : i32
    %c0_i32_1 = arith.constant 0 : i32
    return %c0_i32, %c0_i32_0 : i32, i32
  }
  func.func @transform_2(%arg0: i32) -> (i32, i32) {
    %c0_i32 = arith.constant 0 : i32
    %c0_i32_0 = arith.constant 0 : i32
    %c0_i32_1 = arith.constant 0 : i32
    return %c0_i32, %c0_i32_0 : i32, i32
  }
  func.func @transform_3(%arg0: i32) -> (i32, i32) {
    %c0_i32 = arith.constant 0 : i32
    %c0_i32_0 = arith.constant 0 : i32
    %c0_i32_1 = arith.constant 0 : i32
    return %c0_i32, %c0_i32_0 : i32, i32
  }
  func.func @transform_4(%arg0: i32) -> (i32, i32) {
    %c0_i32 = arith.constant 0 : i32
    %c0_i32_0 = arith.constant 0 : i32
    %c0_i32_1 = arith.constant 0 : i32
    return %c0_i32, %c0_i32_0 : i32, i32
  }
  func.func @transform_5(%arg0: i32) -> (i32, i32) {
    %c0_i32 = arith.constant 0 : i32
    %c0_i32_0 = arith.constant 0 : i32
    %c0_i32_1 = arith.constant 0 : i32
    return %c0_i32, %c0_i32_0 : i32, i32
  }
  func.func @transform_6(%arg0: i32) -> (i32, i32) {
    %c0_i32 = arith.constant 0 : i32
    %c0_i32_0 = arith.constant 0 : i32
    %c0_i32_1 = arith.constant 0 : i32
    return %c0_i32, %c0_i32_0 : i32, i32
  }
  func.func @transform_7(%arg0: i32) -> (i32, i32) {
    %c0_i32 = arith.constant 0 : i32
    %c0_i32_0 = arith.constant 0 : i32
    %c0_i32_1 = arith.constant 0 : i32
    return %c0_i32, %c0_i32_0 : i32, i32
  }
}

</mosaic_0001>

<llo_original>
// kernel: yolov12_no_concat_forward.1
$region0: #{yolov12_no_concat_forward.1}
  #allocation0 [shape = 'u32[]', space=smem, size = 0x4, offset = 0x4, fixed_abs, tag = 'smem constant byte address 0x4 - core index']
  #allocation1 [shape = 'u32[144,128]{1,0:T(1,128)}', space=vmem, size = 0x12000, scoped, tag = 'internal scratch']
  %s0 = inlined_call_operand.vmem [shape: bf16[32,384], index: 0, kind: input, shape index: {}]
  %s1 = inlined_call_operand.vmem [shape: bf16[384,384], index: 1, kind: input, shape index: {}]
  %s2 = inlined_call_operand.vmem [shape: f32[32,384], index: 2, kind: input, shape index: {}]
  %s3 = inlined_call_operand.vmem [shape: bf16[384,64], index: 3, kind: input, shape index: {}]
  %s4 = inlined_call_operand.vmem [shape: f32[1,64], index: 4, kind: input, shape index: {}]
  %s5 = inlined_call_operand.vmem [shape: bf16[64,128], index: 5, kind: input, shape index: {}]
  %s6 = inlined_call_operand.vmem [shape: f32[1,128], index: 6, kind: input, shape index: {}]
  %s7 = inlined_call_operand.vmem [shape: f32[32,128], index: 7, kind: output, shape index: {}]
  %s8 = sld [smem:[#allocation0]]
  $region38: #{yolov12_no_concat_forward.1} parent=0
    _
  %s10 = ssub.s32 1, %s8
  %s11 = scalar_select 0, %s10, %s8
  // Predicated region
  $region2: #{yolov12_no_concat_forward.1} parent=0 // pred_check
    _
  $region3: #{yolov12_no_concat_forward.1} parent=0 // pred_check_branch
    %13 = sbr.rel (0) target = $region5
  $region4: #{yolov12_no_concat_forward.1} parent=0 // pred_region
    _
  $region5: #{yolov12_no_concat_forward.1} parent=0 // pred_fallthru
    _
  // Predicated region
  $region6: #{yolov12_no_concat_forward.1} parent=0 // pred_check
    _
  $region7: #{yolov12_no_concat_forward.1} parent=0 // pred_check_branch
    %15 = sbr.rel (0) target = $region9
  $region8: #{yolov12_no_concat_forward.1} parent=0 // pred_region
    _
  $region9: #{yolov12_no_concat_forward.1} parent=0 // pred_fallthru
    _
  // Predicated region
  $region10: #{yolov12_no_concat_forward.1} parent=0 // pred_check
    _
  $region11: #{yolov12_no_concat_forward.1} parent=0 // pred_check_branch
    %17 = sbr.rel (0) target = $region13
  $region12: #{yolov12_no_concat_forward.1} parent=0 // pred_region
    _
  $region13: #{yolov12_no_concat_forward.1} parent=0 // pred_fallthru
    _
  // Predicated region
  $region14: #{yolov12_no_concat_forward.1} parent=0 // pred_check
    _
  $region15: #{yolov12_no_concat_forward.1} parent=0 // pred_check_branch
    %19 = sbr.rel (0) target = $region17
  $region16: #{yolov12_no_concat_forward.1} parent=0 // pred_region
    _
  $region17: #{yolov12_no_concat_forward.1} parent=0 // pred_fallthru
    _
  // Predicated region
  $region18: #{yolov12_no_concat_forward.1} parent=0 // pred_check
    _
  $region19: #{yolov12_no_concat_forward.1} parent=0 // pred_check_branch
    %21 = sbr.rel (0) target = $region21
  $region20: #{yolov12_no_concat_forward.1} parent=0 // pred_region
    _
  $region21: #{yolov12_no_concat_forward.1} parent=0 // pred_fallthru
    _
  // Predicated region
  $region22: #{yolov12_no_concat_forward.1} parent=0 // pred_check
    _
  $region23: #{yolov12_no_concat_forward.1} parent=0 // pred_check_branch
    %23 = sbr.rel (0) target = $region25
  $region24: #{yolov12_no_concat_forward.1} parent=0 // pred_region
    _
  $region25: #{yolov12_no_concat_forward.1} parent=0 // pred_fallthru
    _
  // Predicated region
  $region26: #{yolov12_no_concat_forward.1} parent=0 // pred_check
    _
  $region27: #{yolov12_no_concat_forward.1} parent=0 // pred_check_branch
    %25 = sbr.rel (0) target = $region29
  $region28: #{yolov12_no_concat_forward.1} parent=0 // pred_region
    _
  $region29: #{yolov12_no_concat_forward.1} parent=0 // pred_fallthru
    _
  %v27 = vld [vmem:[%s0] sm:$0xff]
  %v28 = vld [vmem:[%s0 + $0x8] sm:$0xf]
  %v29 = vld [vmem:[%s0 + $0xc] sm:$0xff]
  %v30 = vld [vmem:[%s0 + $0x14] sm:$0xf]
  %v31 = vld [vmem:[%s0 + $0x18] sm:$0xff]
  %v32 = vld [vmem:[%s0 + $0x20] sm:$0xf]
  %v33 = vld [vmem:[%s0 + $0x24] sm:$0xff]
  %v34 = vld [vmem:[%s0 + $0x2c] sm:$0xf]
  %v35 = vld [vmem:[%s1] sm:$0xff]
  %v36 = vld [vmem:[%s1 + $0x8] sm:$0xf]
  %v37 = vld [vmem:[%s1 + $0xc] sm:$0xff]
  %v38 = vld [vmem:[%s1 + $0x14] sm:$0xf]
  %v39 = vld [vmem:[%s1 + $0x18] sm:$0xff]
  %v40 = vld [vmem:[%s1 + $0x20] sm:$0xf]
  %v41 = vld [vmem:[%s1 + $0x24] sm:$0xff]
  %v42 = vld [vmem:[%s1 + $0x2c] sm:$0xf]
  %v43 = vld [vmem:[%s1 + $0x30] sm:$0xff]
  %v44 = vld [vmem:[%s1 + $0x38] sm:$0xf]
  %v45 = vld [vmem:[%s1 + $0x3c] sm:$0xff]
  %v46 = vld [vmem:[%s1 + $0x44] sm:$0xf]
  %v47 = vld [vmem:[%s1 + $0x48] sm:$0xff]
  %v48 = vld [vmem:[%s1 + $0x50] sm:$0xf]
  %v49 = vld [vmem:[%s1 + $0x54] sm:$0xff]
  %v50 = vld [vmem:[%s1 + $0x5c] sm:$0xf]
  %v51 = vld [vmem:[%s1 + $0x60] sm:$0xff]
  %v52 = vld [vmem:[%s1 + $0x68] sm:$0xf]
  %v53 = vld [vmem:[%s1 + $0x6c] sm:$0xff]
  %v54 = vld [vmem:[%s1 + $0x74] sm:$0xf]
  %v55 = vld [vmem:[%s1 + $0x78] sm:$0xff]
  %v56 = vld [vmem:[%s1 + $0x80] sm:$0xf]
  %v57 = vld [vmem:[%s1 + $0x84] sm:$0xff]
  %v58 = vld [vmem:[%s1 + $0x8c] sm:$0xf]
  %v59 = vld [vmem:[%s1 + $0x90] sm:$0xff]
  %v60 = vld [vmem:[%s1 + $0x98] sm:$0xf]
  %v61 = vld [vmem:[%s1 + $0x9c] sm:$0xff]
  %v62 = vld [vmem:[%s1 + $0xa4] sm:$0xf]
  %v63 = vld [vmem:[%s1 + $0xa8] sm:$0xff]
  %v64 = vld [vmem:[%s1 + $0xb0] sm:$0xf]
  %v65 = vld [vmem:[%s1 + $0xb4] sm:$0xff]
  %v66 = vld [vmem:[%s1 + $0xbc] sm:$0xf]
  %v67 = vld [vmem:[%s1 + $0xc0] sm:$0xff]
  %v68 = vld [vmem:[%s1 + $0xc8] sm:$0xf]
  %v69 = vld [vmem:[%s1 + $0xcc] sm:$0xff]
  %v70 = vld [vmem:[%s1 + $0xd4] sm:$0xf]
  %v71 = vld [vmem:[%s1 + $0xd8] sm:$0xff]
  %v72 = vld [vmem:[%s1 + $0xe0] sm:$0xf]
  %v73 = vld [vmem:[%s1 + $0xe4] sm:$0xff]
  %v74 = vld [vmem:[%s1 + $0xec] sm:$0xf]
  %v75 = vld [vmem:[%s1 + $0xf0] sm:$0xff]
  %v76 = vld [vmem:[%s1 + $0xf8] sm:$0xf]
  %v77 = vld [vmem:[%s1 + $0xfc] sm:$0xff]
  %v78 = vld [vmem:[%s1 + $0x104] sm:$0xf]
  %v79 = vld [vmem:[%s1 + $0x108] sm:$0xff]
  %v80 = vld [vmem:[%s1 + $0x110] sm:$0xf]
  %v81 = vld [vmem:[%s1 + $0x114] sm:$0xff]
  %v82 = vld [vmem:[%s1 + $0x11c] sm:$0xf]
  %v83 = vld [vmem:[%s1 + $0x120] sm:$0xff]
  %v84 = vld [vmem:[%s1 + $0x128] sm:$0xf]
  %v85 = vld [vmem:[%s1 + $0x12c] sm:$0xff]
  %v86 = vld [vmem:[%s1 + $0x134] sm:$0xf]
  %v87 = vld [vmem:[%s1 + $0x138] sm:$0xff]
  %v88 = vld [vmem:[%s1 + $0x140] sm:$0xf]
  %v89 = vld [vmem:[%s1 + $0x144] sm:$0xff]
  %v90 = vld [vmem:[%s1 + $0x14c] sm:$0xf]
  %v91 = vld [vmem:[%s1 + $0x150] sm:$0xff]
  %v92 = vld [vmem:[%s1 + $0x158] sm:$0xf]
  %v93 = vld [vmem:[%s1 + $0x15c] sm:$0xff]
  %v94 = vld [vmem:[%s1 + $0x164] sm:$0xf]
  %v95 = vld [vmem:[%s1 + $0x168] sm:$0xff]
  %v96 = vld [vmem:[%s1 + $0x170] sm:$0xf]
  %v97 = vld [vmem:[%s1 + $0x174] sm:$0xff]
  %v98 = vld [vmem:[%s1 + $0x17c] sm:$0xf]
  %v99 = vld [vmem:[%s1 + $0x180] sm:$0xff]
  %v100 = vld [vmem:[%s1 + $0x188] sm:$0xf]
  %v101 = vld [vmem:[%s1 + $0x18c] sm:$0xff]
  %v102 = vld [vmem:[%s1 + $0x194] sm:$0xf]
  %v103 = vld [vmem:[%s1 + $0x198] sm:$0xff]
  %v104 = vld [vmem:[%s1 + $0x1a0] sm:$0xf]
  %v105 = vld [vmem:[%s1 + $0x1a4] sm:$0xff]
  %v106 = vld [vmem:[%s1 + $0x1ac] sm:$0xf]
  %v107 = vld [vmem:[%s1 + $0x1b0] sm:$0xff]
  %v108 = vld [vmem:[%s1 + $0x1b8] sm:$0xf]
  %v109 = vld [vmem:[%s1 + $0x1bc] sm:$0xff]
  %v110 = vld [vmem:[%s1 + $0x1c4] sm:$0xf]
  %v111 = vld [vmem:[%s1 + $0x1c8] sm:$0xff]
  %v112 = vld [vmem:[%s1 + $0x1d0] sm:$0xf]
  %v113 = vld [vmem:[%s1 + $0x1d4] sm:$0xff]
  %v114 = vld [vmem:[%s1 + $0x1dc] sm:$0xf]
  %v115 = vld [vmem:[%s1 + $0x1e0] sm:$0xff]
  %v116 = vld [vmem:[%s1 + $0x1e8] sm:$0xf]
  %v117 = vld [vmem:[%s1 + $0x1ec] sm:$0xff]
  %v118 = vld [vmem:[%s1 + $0x1f4] sm:$0xf]
  %v119 = vld [vmem:[%s1 + $0x1f8] sm:$0xff]
  %v120 = vld [vmem:[%s1 + $0x200] sm:$0xf]
  %v121 = vld [vmem:[%s1 + $0x204] sm:$0xff]
  %v122 = vld [vmem:[%s1 + $0x20c] sm:$0xf]
  %v123 = vld [vmem:[%s1 + $0x210] sm:$0xff]
  %v124 = vld [vmem:[%s1 + $0x218] sm:$0xf]
  %v125 = vld [vmem:[%s1 + $0x21c] sm:$0xff]
  %v126 = vld [vmem:[%s1 + $0x224] sm:$0xf]
  %v127 = vld [vmem:[%s1 + $0x228] sm:$0xff]
  %v128 = vld [vmem:[%s1 + $0x230] sm:$0xf]
  %v129 = vld [vmem:[%s1 + $0x234] sm:$0xff]
  %v130 = vld [vmem:[%s1 + $0x23c] sm:$0xf]
  %v131 = vld [vmem:[%s2] sm:$0xff]
  %v132 = vld [vmem:[%s2 + $0x8] sm:$0xff]
  %v133 = vld [vmem:[%s2 + $0x10] sm:$0xff]
  %v134 = vld [vmem:[%s2 + $0x18] sm:$0xff]
  %v135 = vld [vmem:[%s2 + $0x20] sm:$0xff]
  %v136 = vld [vmem:[%s2 + $0x28] sm:$0xff]
  %v137 = vld [vmem:[%s2 + $0x30] sm:$0xff]
  %v138 = vld [vmem:[%s2 + $0x38] sm:$0xff]
  %v139 = vld [vmem:[%s2 + $0x40] sm:$0xff]
  %v140 = vld [vmem:[%s2 + $0x48] sm:$0xff]
  %v141 = vld [vmem:[%s2 + $0x50] sm:$0xff]
  %v142 = vld [vmem:[%s2 + $0x58] sm:$0xff]
  %v151 = vunpack.c.l.b16 %v27
  %v152 = vunpack.c.h.b16 %v27
  %v153 = vunpack.c.l.b16 %v28
  %v154 = vunpack.c.l.b16 %v29
  %v155 = vunpack.c.h.b16 %v29
  %v156 = vunpack.c.l.b16 %v30
  %v157 = vunpack.c.l.b16 %v31
  %v158 = vunpack.c.h.b16 %v31
  %v159 = vunpack.c.l.b16 %v32
  %v160 = vunpack.c.l.b16 %v33
  %v161 = vunpack.c.h.b16 %v33
  %v162 = vunpack.c.l.b16 %v34
  %v163 = vpack.c.b16 %v154, %v151
  %v164 = vpack.c.b16 %v155, %v152
  %v165 = vpack.c.b16 %v156, %v153
  %v166 = vpack.c.b16 %v160, %v157
  %v167 = vpack.c.b16 %v161, %v158
  %v168 = vpack.c.b16 %v162, %v159
  %v271 = vunpack.c.l.b16 %v35
  %v272 = vunpack.c.h.b16 %v35
  %v273 = vunpack.c.l.b16 %v36
  %v274 = vunpack.c.l.b16 %v37
  %v275 = vunpack.c.h.b16 %v37
  %v276 = vunpack.c.l.b16 %v38
  %v277 = vunpack.c.l.b16 %v39
  %v278 = vunpack.c.h.b16 %v39
  %v279 = vunpack.c.l.b16 %v40
  %v280 = vunpack.c.l.b16 %v41
  %v281 = vunpack.c.h.b16 %v41
  %v282 = vunpack.c.l.b16 %v42
  %v283 = vunpack.c.l.b16 %v43
  %v284 = vunpack.c.h.b16 %v43
  %v285 = vunpack.c.l.b16 %v44
  %v286 = vunpack.c.l.b16 %v45
  %v287 = vunpack.c.h.b16 %v45
  %v288 = vunpack.c.l.b16 %v46
  %v289 = vunpack.c.l.b16 %v47
  %v290 = vunpack.c.h.b16 %v47
  %v291 = vunpack.c.l.b16 %v48
  %v292 = vunpack.c.l.b16 %v49
  %v293 = vunpack.c.h.b16 %v49
  %v294 = vunpack.c.l.b16 %v50
  %v295 = vunpack.c.l.b16 %v51
  %v296 = vunpack.c.h.b16 %v51
  %v297 = vunpack.c.l.b16 %v52
  %v298 = vunpack.c.l.b16 %v53
  %v299 = vunpack.c.h.b16 %v53
  %v300 = vunpack.c.l.b16 %v54
  %v301 = vunpack.c.l.b16 %v55
  %v302 = vunpack.c.h.b16 %v55
  %v303 = vunpack.c.l.b16 %v56
  %v304 = vunpack.c.l.b16 %v57
  %v305 = vunpack.c.h.b16 %v57
  %v306 = vunpack.c.l.b16 %v58
  %v307 = vunpack.c.l.b16 %v59
  %v308 = vunpack.c.h.b16 %v59
  %v309 = vunpack.c.l.b16 %v60
  %v310 = vunpack.c.l.b16 %v61
  %v311 = vunpack.c.h.b16 %v61
  %v312 = vunpack.c.l.b16 %v62
  %v313 = vunpack.c.l.b16 %v63
  %v314 = vunpack.c.h.b16 %v63
  %v315 = vunpack.c.l.b16 %v64
  %v316 = vunpack.c.l.b16 %v65
  %v317 = vunpack.c.h.b16 %v65
  %v318 = vunpack.c.l.b16 %v66
  %v319 = vunpack.c.l.b16 %v67
  %v320 = vunpack.c.h.b16 %v67
  %v321 = vunpack.c.l.b16 %v68
  %v322 = vunpack.c.l.b16 %v69
  %v323 = vunpack.c.h.b16 %v69
  %v324 = vunpack.c.l.b16 %v70
  %v325 = vunpack.c.l.b16 %v71
  %v326 = vunpack.c.h.b16 %v71
  %v327 = vunpack.c.l.b16 %v72
  %v328 = vunpack.c.l.b16 %v73
  %v329 = vunpack.c.h.b16 %v73
  %v330 = vunpack.c.l.b16 %v74
  %v331 = vunpack.c.l.b16 %v75
  %v332 = vunpack.c.h.b16 %v75
  %v333 = vunpack.c.l.b16 %v76
  %v334 = vunpack.c.l.b16 %v77
  %v335 = vunpack.c.h.b16 %v77
  %v336 = vunpack.c.l.b16 %v78
  %v337 = vunpack.c.l.b16 %v79
  %v338 = vunpack.c.h.b16 %v79
  %v339 = vunpack.c.l.b16 %v80
  %v340 = vunpack.c.l.b16 %v81
  %v341 = vunpack.c.h.b16 %v81
  %v342 = vunpack.c.l.b16 %v82
  %v343 = vunpack.c.l.b16 %v83
  %v344 = vunpack.c.h.b16 %v83
  %v345 = vunpack.c.l.b16 %v84
  %v346 = vunpack.c.l.b16 %v85
  %v347 = vunpack.c.h.b16 %v85
  %v348 = vunpack.c.l.b16 %v86
  %v349 = vunpack.c.l.b16 %v87
  %v350 = vunpack.c.h.b16 %v87
  %v351 = vunpack.c.l.b16 %v88
  %v352 = vunpack.c.l.b16 %v89
  %v353 = vunpack.c.h.b16 %v89
  %v354 = vunpack.c.l.b16 %v90
  %v355 = vunpack.c.l.b16 %v91
  %v356 = vunpack.c.h.b16 %v91
  %v357 = vunpack.c.l.b16 %v92
  %v358 = vunpack.c.l.b16 %v93
  %v359 = vunpack.c.h.b16 %v93
  %v360 = vunpack.c.l.b16 %v94
  %v361 = vunpack.c.l.b16 %v95
  %v362 = vunpack.c.h.b16 %v95
  %v363 = vunpack.c.l.b16 %v96
  %v364 = vunpack.c.l.b16 %v97
  %v365 = vunpack.c.h.b16 %v97
  %v366 = vunpack.c.l.b16 %v98
  %v367 = vunpack.c.l.b16 %v99
  %v368 = vunpack.c.h.b16 %v99
  %v369 = vunpack.c.l.b16 %v100
  %v370 = vunpack.c.l.b16 %v101
  %v371 = vunpack.c.h.b16 %v101
  %v372 = vunpack.c.l.b16 %v102
  %v373 = vunpack.c.l.b16 %v103
  %v374 = vunpack.c.h.b16 %v103
  %v375 = vunpack.c.l.b16 %v104
  %v376 = vunpack.c.l.b16 %v105
  %v377 = vunpack.c.h.b16 %v105
  %v378 = vunpack.c.l.b16 %v106
  %v379 = vunpack.c.l.b16 %v107
  %v380 = vunpack.c.h.b16 %v107
  %v381 = vunpack.c.l.b16 %v108
  %v382 = vunpack.c.l.b16 %v109
  %v383 = vunpack.c.h.b16 %v109
  %v384 = vunpack.c.l.b16 %v110
  %v385 = vunpack.c.l.b16 %v111
  %v386 = vunpack.c.h.b16 %v111
  %v387 = vunpack.c.l.b16 %v112
  %v388 = vunpack.c.l.b16 %v113
  %v389 = vunpack.c.h.b16 %v113
  %v390 = vunpack.c.l.b16 %v114
  %v391 = vunpack.c.l.b16 %v115
  %v392 = vunpack.c.h.b16 %v115
  %v393 = vunpack.c.l.b16 %v116
  %v394 = vunpack.c.l.b16 %v117
  %v395 = vunpack.c.h.b16 %v117
  %v396 = vunpack.c.l.b16 %v118
  %v397 = vunpack.c.l.b16 %v119
  %v398 = vunpack.c.h.b16 %v119
  %v399 = vunpack.c.l.b16 %v120
  %v400 = vunpack.c.l.b16 %v121
  %v401 = vunpack.c.h.b16 %v121
  %v402 = vunpack.c.l.b16 %v122
  %v403 = vunpack.c.l.b16 %v123
  %v404 = vunpack.c.h.b16 %v123
  %v405 = vunpack.c.l.b16 %v124
  %v406 = vunpack.c.l.b16 %v125
  %v407 = vunpack.c.h.b16 %v125
  %v408 = vunpack.c.l.b16 %v126
  %v409 = vunpack.c.l.b16 %v127
  %v410 = vunpack.c.h.b16 %v127
  %v411 = vunpack.c.l.b16 %v128
  %v412 = vunpack.c.l.b16 %v129
  %v413 = vunpack.c.h.b16 %v129
  %v414 = vunpack.c.l.b16 %v130
  %v415 = vpack.c.b16 %v274, %v271
  %v416 = vpack.c.b16 %v275, %v272
  %v417 = vpack.c.b16 %v276, %v273
  %v418 = vpack.c.b16 %v280, %v277
  %v419 = vpack.c.b16 %v281, %v278
  %v420 = vpack.c.b16 %v282, %v279
  %v421 = vpack.c.b16 %v286, %v283
  %v422 = vpack.c.b16 %v287, %v284
  %v423 = vpack.c.b16 %v288, %v285
  %v424 = vpack.c.b16 %v292, %v289
  %v425 = vpack.c.b16 %v293, %v290
  %v426 = vpack.c.b16 %v294, %v291
  %v427 = vpack.c.b16 %v298, %v295
  %v428 = vpack.c.b16 %v299, %v296
  %v429 = vpack.c.b16 %v300, %v297
  %v430 = vpack.c.b16 %v304, %v301
  %v431 = vpack.c.b16 %v305, %v302
  %v432 = vpack.c.b16 %v306, %v303
  %v433 = vpack.c.b16 %v310, %v307
  %v434 = vpack.c.b16 %v311, %v308
  %v435 = vpack.c.b16 %v312, %v309
  %v436 = vpack.c.b16 %v316, %v313
  %v437 = vpack.c.b16 %v317, %v314
  %v438 = vpack.c.b16 %v318, %v315
  %v439 = vpack.c.b16 %v322, %v319
  %v440 = vpack.c.b16 %v323, %v320
  %v441 = vpack.c.b16 %v324, %v321
  %v442 = vpack.c.b16 %v328, %v325
  %v443 = vpack.c.b16 %v329, %v326
  %v444 = vpack.c.b16 %v330, %v327
  %v445 = vpack.c.b16 %v334, %v331
  %v446 = vpack.c.b16 %v335, %v332
  %v447 = vpack.c.b16 %v336, %v333
  %v448 = vpack.c.b16 %v340, %v337
  %v449 = vpack.c.b16 %v341, %v338
  %v450 = vpack.c.b16 %v342, %v339
  %v451 = vpack.c.b16 %v346, %v343
  %v452 = vpack.c.b16 %v347, %v344
  %v453 = vpack.c.b16 %v348, %v345
  %v454 = vpack.c.b16 %v352, %v349
  %v455 = vpack.c.b16 %v353, %v350
  %v456 = vpack.c.b16 %v354, %v351
  %v457 = vpack.c.b16 %v358, %v355
  %v458 = vpack.c.b16 %v359, %v356
  %v459 = vpack.c.b16 %v360, %v357
  %v460 = vpack.c.b16 %v364, %v361
  %v461 = vpack.c.b16 %v365, %v362
  %v462 = vpack.c.b16 %v366, %v363
  %v463 = vpack.c.b16 %v370, %v367
  %v464 = vpack.c.b16 %v371, %v368
  %v465 = vpack.c.b16 %v372, %v369
  %v466 = vpack.c.b16 %v376, %v373
  %v467 = vpack.c.b16 %v377, %v374
  %v468 = vpack.c.b16 %v378, %v375
  %v469 = vpack.c.b16 %v382, %v379
  %v470 = vpack.c.b16 %v383, %v380
  %v471 = vpack.c.b16 %v384, %v381
  %v472 = vpack.c.b16 %v388, %v385
  %v473 = vpack.c.b16 %v389, %v386
  %v474 = vpack.c.b16 %v390, %v387
  %v475 = vpack.c.b16 %v394, %v391
  %v476 = vpack.c.b16 %v395, %v392
  %v477 = vpack.c.b16 %v396, %v393
  %v478 = vpack.c.b16 %v400, %v397
  %v479 = vpack.c.b16 %v401, %v398
  %v480 = vpack.c.b16 %v402, %v399
  %v481 = vpack.c.b16 %v406, %v403
  %v482 = vpack.c.b16 %v407, %v404
  %v483 = vpack.c.b16 %v408, %v405
  %v484 = vpack.c.b16 %v412, %v409
  %v485 = vpack.c.b16 %v413, %v410
  %v486 = vpack.c.b16 %v414, %v411
  %559 = vmatprep.subr.bf16.mxu0 %v416
  %560 = vmatpush1.bf16.msra.mxu0 %v415
  %561 = vmatprep.subr.bf16.mxu0 %v419
  %562 = vmatpush1.bf16.msra.mxu0 %v418
  %563 = vmatprep.subr.bf16.mxu0 %v422
  %564 = vmatpush1.bf16.msra.mxu0 %v421
  %565 = vmatprep.subr.bf16.mxu0 %v425
  %566 = vmatpush1.bf16.msra.mxu0 %v424
  %567 = vmatprep.subr.bf16.mxu0 %v428
  %568 = vmatpush1.bf16.msra.mxu0 %v427
  %569 = vmatprep.subr.bf16.mxu0 %v431
  %570 = vmatpush1.bf16.msra.mxu0 %v430
  %571 = vmatprep.subr.bf16.mxu0 %v434
  %572 = vmatpush1.bf16.msra.mxu0 %v433
  %573 = vmatprep.subr.bf16.mxu0 %v437
  %574 = vmatpush1.bf16.msra.mxu0 %v436
  %575 = vmatprep.subr.bf16.mxu0 %v440
  %576 = vmatpush1.bf16.msra.mxu0 %v439
  %577 = vmatprep.subr.bf16.mxu0 %v443
  %578 = vmatpush1.bf16.msra.mxu0 %v442
  %579 = vmatprep.subr.bf16.mxu0 %v446
  %580 = vmatpush1.bf16.msra.mxu0 %v445
  %581 = vmatprep.subr.bf16.mxu0 %v449
  %582 = vmatpush1.bf16.msra.mxu0 %v448
  %583 = vmatprep.subr.bf16.mxu0 %v452
  %584 = vmatpush1.bf16.msra.mxu0 %v451
  %585 = vmatprep.subr.bf16.mxu0 %v455
  %586 = vmatpush1.bf16.msra.mxu0 %v454
  %587 = vmatprep.subr.bf16.mxu0 %v458
  %588 = vmatpush1.bf16.msra.mxu0 %v457
  %589 = vmatprep.subr.bf16.mxu0 %v461
  %590 = vmatpush1.bf16.msra.mxu0 %v460
  %591 = vmatprep.mubr.bf16.mxu0 %v164
  %592 = vmatmul.mubr.bf16.gmra.mrb[0].mxu0 %v163
  %v593 = vpop.f32.mrb[0].mxu0
  %v594 = vadd.f32 %v131, %v593
  %v595 = vpop.f32.mrb[0].mxu0
  %v596 = vadd.f32 %v132, %v595
  %v597 = vpop.f32.mrb[0].mxu0
  %v598 = vadd.f32 %v134, %v597
  %v599 = vpop.f32.mrb[0].mxu0
  %v600 = vadd.f32 %v135, %v599
  %601 = vmatprep.mubr.bf16.mxu0 %v167
  %602 = vmatmul.mubr.bf16.gmra.mrb[0].mxu0 %v166
  %v603 = vpop.f32.mrb[0].mxu0
  %v604 = vadd.f32 %v137, %v603
  %v605 = vpop.f32.mrb[0].mxu0
  %v606 = vadd.f32 %v138, %v605
  %v607 = vpop.f32.mrb[0].mxu0
  %v608 = vadd.f32 %v140, %v607
  %v609 = vpop.f32.mrb[0].mxu0
  %v610 = vadd.f32 %v141, %v609
  %611 = vdwg.mxu0
  %612 = vmatprep.subr.bf16.mxu0 %v464
  %613 = vmatpush1.bf16.msra.mxu0 %v463
  %614 = vmatprep.subr.bf16.mxu0 %v467
  %615 = vmatpush1.bf16.msra.mxu0 %v466
  %616 = vmatprep.subr.bf16.mxu0 %v470
  %617 = vmatpush1.bf16.msra.mxu0 %v469
  %618 = vmatprep.subr.bf16.mxu0 %v473
  %619 = vmatpush1.bf16.msra.mxu0 %v472
  %620 = vmatprep.subr.bf16.mxu0 %v476
  %621 = vmatpush1.bf16.msra.mxu0 %v475
  %622 = vmatprep.subr.bf16.mxu0 %v479
  %623 = vmatpush1.bf16.msra.mxu0 %v478
  %624 = vmatprep.subr.bf16.mxu0 %v482
  %625 = vmatpush1.bf16.msra.mxu0 %v481
  %626 = vmatprep.subr.bf16.mxu0 %v485
  %627 = vmatpush1.bf16.msra.mxu0 %v484
  %628 = vmatprep.subr.bf16.mxu0 0
  %629 = vmatpush1.bf16.msra.mxu0 0
  %630 = vmatprep.subr.bf16.mxu0 0
  %631 = vmatpush1.bf16.msra.mxu0 0
  %632 = vmatprep.subr.bf16.mxu0 0
  %633 = vmatpush1.bf16.msra.mxu0 0
  %634 = vmatprep.subr.bf16.mxu0 0
  %635 = vmatpush1.bf16.msra.mxu0 0
  %636 = vmatprep.subr.bf16.mxu0 0
  %637 = vmatpush1.bf16.msra.mxu0 0
  %638 = vmatprep.subr.bf16.mxu0 0
  %639 = vmatpush1.bf16.msra.mxu0 0
  %640 = vmatprep.subr.bf16.mxu0 0
  %641 = vmatpush1.bf16.msra.mxu0 0
  %642 = vmatprep.subr.bf16.mxu0 0
  %643 = vmatpush1.bf16.msra.mxu0 0
  %644 = vmatprep.mubr.bf16.mxu0 0
  %645 = vmatmul.mubr.bf16.gmra.mrb[0].mxu0 %v165
  %v646 = vpop.f32.mrb[0].mxu0
  %v647 = vadd.f32 %v594, %v646
  %v648 = vpop.f32.mrb[0].mxu0
  %v649 = vadd.f32 %v596, %v648
  %v650 = vpop.f32.mrb[0].mxu0
  %v651 = vadd.f32 %v598, %v650
  %v652 = vpop.f32.mrb[0].mxu0
  %v653 = vadd.f32 %v600, %v652
  %654 = vmatprep.mubr.bf16.mxu0 0
  %655 = vmatmul.mubr.bf16.gmra.mrb[0].mxu0 %v168
  %v656 = vpop.f32.mrb[0].mxu0
  %v657 = vadd.f32 %v604, %v656
  %v658 = vpop.f32.mrb[0].mxu0
  %v659 = vadd.f32 %v606, %v658
  %v660 = vpop.f32.mrb[0].mxu0
  %v661 = vadd.f32 %v608, %v660
  %v662 = vpop.f32.mrb[0].mxu0
  %v663 = vadd.f32 %v610, %v662
  %664 = vdwg.mxu0
  %665 = vmatprep.subr.bf16.mxu0 0
  %666 = vmatpush1.bf16.msra.mxu0 %v417
  %667 = vmatprep.subr.bf16.mxu0 0
  %668 = vmatpush1.bf16.msra.mxu0 %v420
  %669 = vmatprep.subr.bf16.mxu0 0
  %670 = vmatpush1.bf16.msra.mxu0 %v423
  %671 = vmatprep.subr.bf16.mxu0 0
  %672 = vmatpush1.bf16.msra.mxu0 %v426
  %673 = vmatprep.subr.bf16.mxu0 0
  %674 = vmatpush1.bf16.msra.mxu0 %v429
  %675 = vmatprep.subr.bf16.mxu0 0
  %676 = vmatpush1.bf16.msra.mxu0 %v432
  %677 = vmatprep.subr.bf16.mxu0 0
  %678 = vmatpush1.bf16.msra.mxu0 %v435
  %679 = vmatprep.subr.bf16.mxu0 0
  %680 = vmatpush1.bf16.msra.mxu0 %v438
  %681 = vmatprep.subr.bf16.mxu0 0
  %682 = vmatpush1.bf16.msra.mxu0 %v441
  %683 = vmatprep.subr.bf16.mxu0 0
  %684 = vmatpush1.bf16.msra.mxu0 %v444
  %685 = vmatprep.subr.bf16.mxu0 0
  %686 = vmatpush1.bf16.msra.mxu0 %v447
  %687 = vmatprep.subr.bf16.mxu0 0
  %688 = vmatpush1.bf16.msra.mxu0 %v450
  %689 = vmatprep.subr.bf16.mxu0 0
  %690 = vmatpush1.bf16.msra.mxu0 %v453
  %691 = vmatprep.subr.bf16.mxu0 0
  %692 = vmatpush1.bf16.msra.mxu0 %v456
  %693 = vmatprep.subr.bf16.mxu0 0
  %694 = vmatpush1.bf16.msra.mxu0 %v459
  %695 = vmatprep.subr.bf16.mxu0 0
  %696 = vmatpush1.bf16.msra.mxu0 %v462
  %697 = vmatprep.mubr.bf16.mxu0 %v164
  %698 = vmatmul.mubr.bf16.gmra.mrb[0].mxu0 %v163
  %v699 = vpop.f32.mrb[0].mxu0
  %v700 = vadd.f32 %v133, %v699
  %v701 = vpop.f32.mrb[0].mxu0
  %v702 = vpop.f32.mrb[0].mxu0
  %v703 = vadd.f32 %v136, %v702
  %v704 = vpop.f32.mrb[0].mxu0
  %705 = vmatprep.mubr.bf16.mxu0 %v167
  %706 = vmatmul.mubr.bf16.gmra.mrb[0].mxu0 %v166
  %v707 = vpop.f32.mrb[0].mxu0
  %v708 = vadd.f32 %v139, %v707
  %v709 = vpop.f32.mrb[0].mxu0
  %v710 = vpop.f32.mrb[0].mxu0
  %v711 = vadd.f32 %v142, %v710
  %v712 = vpop.f32.mrb[0].mxu0
  %713 = vdwg.mxu0
  %714 = vmatprep.subr.bf16.mxu0 0
  %715 = vmatpush1.bf16.msra.mxu0 %v465
  %716 = vmatprep.subr.bf16.mxu0 0
  %717 = vmatpush1.bf16.msra.mxu0 %v468
  %718 = vmatprep.subr.bf16.mxu0 0
  %719 = vmatpush1.bf16.msra.mxu0 %v471
  %720 = vmatprep.subr.bf16.mxu0 0
  %721 = vmatpush1.bf16.msra.mxu0 %v474
  %722 = vmatprep.subr.bf16.mxu0 0
  %723 = vmatpush1.bf16.msra.mxu0 %v477
  %724 = vmatprep.subr.bf16.mxu0 0
  %725 = vmatpush1.bf16.msra.mxu0 %v480
  %726 = vmatprep.subr.bf16.mxu0 0
  %727 = vmatpush1.bf16.msra.mxu0 %v483
  %728 = vmatprep.subr.bf16.mxu0 0
  %729 = vmatpush1.bf16.msra.mxu0 %v486
  %730 = vmatprep.subr.bf16.mxu0 0
  %731 = vmatpush1.bf16.msra.mxu0 0
  %732 = vmatprep.subr.bf16.mxu0 0
  %733 = vmatpush1.bf16.msra.mxu0 0
  %734 = vmatprep.subr.bf16.mxu0 0
  %735 = vmatpush1.bf16.msra.mxu0 0
  %736 = vmatprep.subr.bf16.mxu0 0
  %737 = vmatpush1.bf16.msra.mxu0 0
  %738 = vmatprep.subr.bf16.mxu0 0
  %739 = vmatpush1.bf16.msra.mxu0 0
  %740 = vmatprep.subr.bf16.mxu0 0
  %741 = vmatpush1.bf16.msra.mxu0 0
  %742 = vmatprep.subr.bf16.mxu0 0
  %743 = vmatpush1.bf16.msra.mxu0 0
  %744 = vmatprep.subr.bf16.mxu0 0
  %745 = vmatpush1.bf16.msra.mxu0 0
  %746 = vmatprep.mubr.bf16.mxu0 0
  %747 = vmatmul.mubr.bf16.gmra.mrb[0].mxu0 %v165
  %v748 = vpop.f32.mrb[0].mxu0
  %v749 = vadd.f32 %v700, %v748
  %v750 = vpop.f32.mrb[0].mxu0
  %v751 = vpop.f32.mrb[0].mxu0
  %v752 = vadd.f32 %v703, %v751
  %v753 = vpop.f32.mrb[0].mxu0
  %754 = vmatprep.mubr.bf16.mxu0 0
  %755 = vmatmul.mubr.bf16.gmra.mrb[0].mxu0 %v168
  %v756 = vpop.f32.mrb[0].mxu0
  %v757 = vadd.f32 %v708, %v756
  %v758 = vpop.f32.mrb[0].mxu0
  %v759 = vpop.f32.mrb[0].mxu0
  %v760 = vadd.f32 %v711, %v759
  %v761 = vpop.f32.mrb[0].mxu0
  %762 = vdwg.mxu0
  %v763 = vsub.f32 0.0, %v647
  %v764 = vsub.f32 0.0, %v649
  %v765 = vsub.f32 0.0, %v749
  %v766 = vsub.f32 0.0, %v651
  %v767 = vsub.f32 0.0, %v653
  %v768 = vsub.f32 0.0, %v752
  %v769 = vsub.f32 0.0, %v657
  %v770 = vsub.f32 0.0, %v659
  %v771 = vsub.f32 0.0, %v757
  %v772 = vsub.f32 0.0, %v661
  %v773 = vsub.f32 0.0, %v663
  %v774 = vsub.f32 0.0, %v760
  %v775 = vmul.f32 %v763, 1.442695
  %v776 = vpow.pop %v775
  %v777 = vmul.f32 %v764, 1.442695
  %v778 = vpow.pop %v777
  %v779 = vmul.f32 %v765, 1.442695
  %v780 = vpow.pop %v779
  %v781 = vmul.f32 %v766, 1.442695
  %v782 = vpow.pop %v781
  %v783 = vmul.f32 %v767, 1.442695
  %v784 = vpow.pop %v783
  %v785 = vmul.f32 %v768, 1.442695
  %v786 = vpow.pop %v785
  %v787 = vmul.f32 %v769, 1.442695
  %v788 = vpow.pop %v787
  %v789 = vmul.f32 %v770, 1.442695
  %v790 = vpow.pop %v789
  %v791 = vmul.f32 %v771, 1.442695
  %v792 = vpow.pop %v791
  %v793 = vmul.f32 %v772, 1.442695
  %v794 = vpow.pop %v793
  %v795 = vmul.f32 %v773, 1.442695
  %v796 = vpow.pop %v795
  %v797 = vmul.f32 %v774, 1.442695
  %v798 = vpow.pop %v797
  %v799 = vadd.f32 %v776, 1.0
  %v800 = vadd.f32 %v778, 1.0
  %v801 = vadd.f32 %v780, 1.0
  %v802 = vadd.f32 %v782, 1.0
  %v803 = vadd.f32 %v784, 1.0
  %v804 = vadd.f32 %v786, 1.0
  %v805 = vadd.f32 %v788, 1.0
  %v806 = vadd.f32 %v790, 1.0
  %v807 = vadd.f32 %v792, 1.0
  %v808 = vadd.f32 %v794, 1.0
  %v809 = vadd.f32 %v796, 1.0
  %v810 = vadd.f32 %v798, 1.0
  %v811 = vrcp.pop %v799
  %v812 = vmul.f32 %v647, %v811
  %v813 = vrcp.pop %v800
  %v814 = vmul.f32 %v649, %v813
  %v815 = vrcp.pop %v801
  %v816 = vmul.f32 %v749, %v815
  %v817 = vrcp.pop %v802
  %v818 = vmul.f32 %v651, %v817
  %v819 = vrcp.pop %v803
  %v820 = vmul.f32 %v653, %v819
  %v821 = vrcp.pop %v804
  %v822 = vmul.f32 %v752, %v821
  %v823 = vrcp.pop %v805
  %v824 = vmul.f32 %v657, %v823
  %v825 = vrcp.pop %v806
  %v826 = vmul.f32 %v659, %v825
  %v827 = vrcp.pop %v807
  %v828 = vmul.f32 %v757, %v827
  %v829 = vrcp.pop %v808
  %v830 = vmul.f32 %v661, %v829
  %v831 = vrcp.pop %v809
  %v832 = vmul.f32 %v663, %v831
  %v833 = vrcp.pop %v810
  %v834 = vmul.f32 %v760, %v833
  %v835 = vpack.c.bf16 %v818, %v812
  %v836 = vpack.c.bf16 %v820, %v814
  %v837 = vpack.c.bf16 %v822, %v816
  %v838 = vpack.c.bf16 %v830, %v824
  %v839 = vpack.c.bf16 %v832, %v826
  %v840 = vpack.c.bf16 %v834, %v828
  %v841 = vld [vmem:[%s3] sm:$0xf]
  %v842 = vld [vmem:[%s3 + $0x4] sm:$0xf]
  %v843 = vld [vmem:[%s3 + $0x8] sm:$0xf]
  %v844 = vld [vmem:[%s3 + $0xc] sm:$0xf]
  %v845 = vld [vmem:[%s3 + $0x10] sm:$0xf]
  %v846 = vld [vmem:[%s3 + $0x14] sm:$0xf]
  %v847 = vld [vmem:[%s3 + $0x18] sm:$0xf]
  %v848 = vld [vmem:[%s3 + $0x1c] sm:$0xf]
  %v849 = vld [vmem:[%s3 + $0x20] sm:$0xf]
  %v850 = vld [vmem:[%s3 + $0x24] sm:$0xf]
  %v851 = vld [vmem:[%s3 + $0x28] sm:$0xf]
  %v852 = vld [vmem:[%s3 + $0x2c] sm:$0xf]
  %v853 = vld [vmem:[%s3 + $0x30] sm:$0xf]
  %v854 = vld [vmem:[%s3 + $0x34] sm:$0xf]
  %v855 = vld [vmem:[%s3 + $0x38] sm:$0xf]
  %v856 = vld [vmem:[%s3 + $0x3c] sm:$0xf]
  %v857 = vld [vmem:[%s3 + $0x40] sm:$0xf]
  %v858 = vld [vmem:[%s3 + $0x44] sm:$0xf]
  %v859 = vld [vmem:[%s3 + $0x48] sm:$0xf]
  %v860 = vld [vmem:[%s3 + $0x4c] sm:$0xf]
  %v861 = vld [vmem:[%s3 + $0x50] sm:$0xf]
  %v862 = vld [vmem:[%s3 + $0x54] sm:$0xf]
  %v863 = vld [vmem:[%s3 + $0x58] sm:$0xf]
  %v864 = vld [vmem:[%s3 + $0x5c] sm:$0xf]
  %v865 = vld [vmem:[%s3 + $0x60] sm:$0xf]
  %v866 = vld [vmem:[%s3 + $0x64] sm:$0xf]
  %v867 = vld [vmem:[%s3 + $0x68] sm:$0xf]
  %v868 = vld [vmem:[%s3 + $0x6c] sm:$0xf]
  %v869 = vld [vmem:[%s3 + $0x70] sm:$0xf]
  %v870 = vld [vmem:[%s3 + $0x74] sm:$0xf]
  %v871 = vld [vmem:[%s3 + $0x78] sm:$0xf]
  %v872 = vld [vmem:[%s3 + $0x7c] sm:$0xf]
  %v873 = vld [vmem:[%s3 + $0x80] sm:$0xf]
  %v874 = vld [vmem:[%s3 + $0x84] sm:$0xf]
  %v875 = vld [vmem:[%s3 + $0x88] sm:$0xf]
  %v876 = vld [vmem:[%s3 + $0x8c] sm:$0xf]
  %v877 = vld [vmem:[%s3 + $0x90] sm:$0xf]
  %v878 = vld [vmem:[%s3 + $0x94] sm:$0xf]
  %v879 = vld [vmem:[%s3 + $0x98] sm:$0xf]
  %v880 = vld [vmem:[%s3 + $0x9c] sm:$0xf]
  %v881 = vld [vmem:[%s3 + $0xa0] sm:$0xf]
  %v882 = vld [vmem:[%s3 + $0xa4] sm:$0xf]
  %v883 = vld [vmem:[%s3 + $0xa8] sm:$0xf]
  %v884 = vld [vmem:[%s3 + $0xac] sm:$0xf]
  %v885 = vld [vmem:[%s3 + $0xb0] sm:$0xf]
  %v886 = vld [vmem:[%s3 + $0xb4] sm:$0xf]
  %v887 = vld [vmem:[%s3 + $0xb8] sm:$0xf]
  %v888 = vld [vmem:[%s3 + $0xbc] sm:$0xf]
  %v889 = vld [vmem:[%s4] sm:$0x1]
  %v891 = vlaneseq
  %v892 = vshrl.u32 %v891, 7
  %v893 = vsub.s32 0, %v892
  %v894 = vrot.slane %v889, %v893
  %v944 = vunpack.c.l.b16 %v841
  %v945 = vunpack.c.l.b16 %v842
  %v946 = vunpack.c.l.b16 %v843
  %v947 = vunpack.c.l.b16 %v844
  %v948 = vunpack.c.l.b16 %v845
  %v949 = vunpack.c.l.b16 %v846
  %v950 = vunpack.c.l.b16 %v847
  %v951 = vunpack.c.l.b16 %v848
  %v952 = vunpack.c.l.b16 %v849
  %v953 = vunpack.c.l.b16 %v850
  %v954 = vunpack.c.l.b16 %v851
  %v955 = vunpack.c.l.b16 %v852
  %v956 = vunpack.c.l.b16 %v853
  %v957 = vunpack.c.l.b16 %v854
  %v958 = vunpack.c.l.b16 %v855
  %v959 = vunpack.c.l.b16 %v856
  %v960 = vunpack.c.l.b16 %v857
  %v961 = vunpack.c.l.b16 %v858
  %v962 = vunpack.c.l.b16 %v859
  %v963 = vunpack.c.l.b16 %v860
  %v964 = vunpack.c.l.b16 %v861
  %v965 = vunpack.c.l.b16 %v862
  %v966 = vunpack.c.l.b16 %v863
  %v967 = vunpack.c.l.b16 %v864
  %v968 = vunpack.c.l.b16 %v865
  %v969 = vunpack.c.l.b16 %v866
  %v970 = vunpack.c.l.b16 %v867
  %v971 = vunpack.c.l.b16 %v868
  %v972 = vunpack.c.l.b16 %v869
  %v973 = vunpack.c.l.b16 %v870
  %v974 = vunpack.c.l.b16 %v871
  %v975 = vunpack.c.l.b16 %v872
  %v976 = vunpack.c.l.b16 %v873
  %v977 = vunpack.c.l.b16 %v874
  %v978 = vunpack.c.l.b16 %v875
  %v979 = vunpack.c.l.b16 %v876
  %v980 = vunpack.c.l.b16 %v877
  %v981 = vunpack.c.l.b16 %v878
  %v982 = vunpack.c.l.b16 %v879
  %v983 = vunpack.c.l.b16 %v880
  %v984 = vunpack.c.l.b16 %v881
  %v985 = vunpack.c.l.b16 %v882
  %v986 = vunpack.c.l.b16 %v883
  %v987 = vunpack.c.l.b16 %v884
  %v988 = vunpack.c.l.b16 %v885
  %v989 = vunpack.c.l.b16 %v886
  %v990 = vunpack.c.l.b16 %v887
  %v991 = vunpack.c.l.b16 %v888
  %v992 = vpack.c.b16 %v945, %v944
  %v993 = vpack.c.b16 %v947, %v946
  %v994 = vpack.c.b16 %v949, %v948
  %v995 = vpack.c.b16 %v951, %v950
  %v996 = vpack.c.b16 %v953, %v952
  %v997 = vpack.c.b16 %v955, %v954
  %v998 = vpack.c.b16 %v957, %v956
  %v999 = vpack.c.b16 %v959, %v958
  %v1000 = vpack.c.b16 %v961, %v960
  %v1001 = vpack.c.b16 %v963, %v962
  %v1002 = vpack.c.b16 %v965, %v964
  %v1003 = vpack.c.b16 %v967, %v966
  %v1004 = vpack.c.b16 %v969, %v968
  %v1005 = vpack.c.b16 %v971, %v970
  %v1006 = vpack.c.b16 %v973, %v972
  %v1007 = vpack.c.b16 %v975, %v974
  %v1008 = vpack.c.b16 %v977, %v976
  %v1009 = vpack.c.b16 %v979, %v978
  %v1010 = vpack.c.b16 %v981, %v980
  %v1011 = vpack.c.b16 %v983, %v982
  %v1012 = vpack.c.b16 %v985, %v984
  %v1013 = vpack.c.b16 %v987, %v986
  %v1014 = vpack.c.b16 %v989, %v988
  %v1015 = vpack.c.b16 %v991, %v990
  %1040 = vmatprep.subr.bf16.mxu0 0
  %1041 = vmatpush1.bf16.msra.mxu0 %v992
  %1042 = vmatprep.subr.bf16.mxu0 0
  %1043 = vmatpush1.bf16.msra.mxu0 %v993
  %1044 = vmatprep.subr.bf16.mxu0 0
  %1045 = vmatpush1.bf16.msra.mxu0 %v994
  %1046 = vmatprep.subr.bf16.mxu0 0
  %1047 = vmatpush1.bf16.msra.mxu0 %v995
  %1048 = vmatprep.subr.bf16.mxu0 0
  %1049 = vmatpush1.bf16.msra.mxu0 %v996
  %1050 = vmatprep.subr.bf16.mxu0 0
  %1051 = vmatpush1.bf16.msra.mxu0 %v997
  %1052 = vmatprep.subr.bf16.mxu0 0
  %1053 = vmatpush1.bf16.msra.mxu0 %v998
  %1054 = vmatprep.subr.bf16.mxu0 0
  %1055 = vmatpush1.bf16.msra.mxu0 %v999
  %1056 = vmatprep.subr.bf16.mxu0 0
  %1057 = vmatpush1.bf16.msra.mxu0 %v1000
  %1058 = vmatprep.subr.bf16.mxu0 0
  %1059 = vmatpush1.bf16.msra.mxu0 %v1001
  %1060 = vmatprep.subr.bf16.mxu0 0
  %1061 = vmatpush1.bf16.msra.mxu0 %v1002
  %1062 = vmatprep.subr.bf16.mxu0 0
  %1063 = vmatpush1.bf16.msra.mxu0 %v1003
  %1064 = vmatprep.subr.bf16.mxu0 0
  %1065 = vmatpush1.bf16.msra.mxu0 %v1004
  %1066 = vmatprep.subr.bf16.mxu0 0
  %1067 = vmatpush1.bf16.msra.mxu0 %v1005
  %1068 = vmatprep.subr.bf16.mxu0 0
  %1069 = vmatpush1.bf16.msra.mxu0 %v1006
  %1070 = vmatprep.subr.bf16.mxu0 0
  %1071 = vmatpush1.bf16.msra.mxu0 %v1007
  %1072 = vmatprep.mubr.bf16.mxu0 %v836
  %1073 = vmatmul.mubr.bf16.gmra.mrb[0].mxu0 %v835
  %v1074 = vpop.f32.mrb[0].mxu0
  %v1075 = vadd.f32 %v894, %v1074
  %v1076 = vpop.f32.mrb[0].mxu0
  %v1077 = vpop.f32.mrb[0].mxu0
  %v1078 = vadd.f32 %v894, %v1077
  %v1079 = vpop.f32.mrb[0].mxu0
  %1080 = vmatprep.mubr.bf16.mxu0 %v839
  %1081 = vmatmul.mubr.bf16.gmra.mrb[0].mxu0 %v838
  %v1082 = vpop.f32.mrb[0].mxu0
  %v1083 = vadd.f32 %v894, %v1082
  %v1084 = vpop.f32.mrb[0].mxu0
  %v1085 = vpop.f32.mrb[0].mxu0
  %v1086 = vadd.f32 %v894, %v1085
  %v1087 = vpop.f32.mrb[0].mxu0
  %1088 = vdwg.mxu0
  %1089 = vmatprep.subr.bf16.mxu0 0
  %1090 = vmatpush1.bf16.msra.mxu0 %v1008
  %1091 = vmatprep.subr.bf16.mxu0 0
  %1092 = vmatpush1.bf16.msra.mxu0 %v1009
  %1093 = vmatprep.subr.bf16.mxu0 0
  %1094 = vmatpush1.bf16.msra.mxu0 %v1010
  %1095 = vmatprep.subr.bf16.mxu0 0
  %1096 = vmatpush1.bf16.msra.mxu0 %v1011
  %1097 = vmatprep.subr.bf16.mxu0 0
  %1098 = vmatpush1.bf16.msra.mxu0 %v1012
  %1099 = vmatprep.subr.bf16.mxu0 0
  %1100 = vmatpush1.bf16.msra.mxu0 %v1013
  %1101 = vmatprep.subr.bf16.mxu0 0
  %1102 = vmatpush1.bf16.msra.mxu0 %v1014
  %1103 = vmatprep.subr.bf16.mxu0 0
  %1104 = vmatpush1.bf16.msra.mxu0 %v1015
  %1105 = vmatprep.subr.bf16.mxu0 0
  %1106 = vmatpush1.bf16.msra.mxu0 0
  %1107 = vmatprep.subr.bf16.mxu0 0
  %1108 = vmatpush1.bf16.msra.mxu0 0
  %1109 = vmatprep.subr.bf16.mxu0 0
  %1110 = vmatpush1.bf16.msra.mxu0 0
  %1111 = vmatprep.subr.bf16.mxu0 0
  %1112 = vmatpush1.bf16.msra.mxu0 0
  %1113 = vmatprep.subr.bf16.mxu0 0
  %1114 = vmatpush1.bf16.msra.mxu0 0
  %1115 = vmatprep.subr.bf16.mxu0 0
  %1116 = vmatpush1.bf16.msra.mxu0 0
  %1117 = vmatprep.subr.bf16.mxu0 0
  %1118 = vmatpush1.bf16.msra.mxu0 0
  %1119 = vmatprep.subr.bf16.mxu0 0
  %1120 = vmatpush1.bf16.msra.mxu0 0
  %1121 = vmatprep.mubr.bf16.mxu0 0
  %1122 = vmatmul.mubr.bf16.gmra.mrb[0].mxu0 %v837
  %v1123 = vpop.f32.mrb[0].mxu0
  %v1124 = vadd.f32 %v1075, %v1123
  %v1125 = vpop.f32.mrb[0].mxu0
  %v1126 = vpop.f32.mrb[0].mxu0
  %v1127 = vadd.f32 %v1078, %v1126
  %v1128 = vpop.f32.mrb[0].mxu0
  %1129 = vmatprep.mubr.bf16.mxu0 0
  %1130 = vmatmul.mubr.bf16.gmra.mrb[0].mxu0 %v840
  %v1131 = vpop.f32.mrb[0].mxu0
  %v1132 = vadd.f32 %v1083, %v1131
  %v1133 = vpop.f32.mrb[0].mxu0
  %v1134 = vpop.f32.mrb[0].mxu0
  %v1135 = vadd.f32 %v1086, %v1134
  %v1136 = vpop.f32.mrb[0].mxu0
  %1137 = vdwg.mxu0
  %v1138 = vsub.f32 0.0, %v1124
  %v1139 = vsub.f32 0.0, %v1127
  %v1140 = vsub.f32 0.0, %v1132
  %v1141 = vsub.f32 0.0, %v1135
  %v1142 = vmul.f32 %v1138, 1.442695
  %v1143 = vpow.pop %v1142
  %v1144 = vmul.f32 %v1139, 1.442695
  %v1145 = vpow.pop %v1144
  %v1146 = vmul.f32 %v1140, 1.442695
  %v1147 = vpow.pop %v1146
  %v1148 = vmul.f32 %v1141, 1.442695
  %v1149 = vpow.pop %v1148
  %v1150 = vadd.f32 %v1143, 1.0
  %v1151 = vadd.f32 %v1145, 1.0
  %v1152 = vadd.f32 %v1147, 1.0
  %v1153 = vadd.f32 %v1149, 1.0
  %v1154 = vrcp.pop %v1150
  %v1155 = vmul.f32 %v1124, %v1154
  %v1156 = vrcp.pop %v1151
  %v1157 = vmul.f32 %v1127, %v1156
  %v1158 = vrcp.pop %v1152
  %v1159 = vmul.f32 %v1132, %v1158
  %v1160 = vrcp.pop %v1153
  %v1161 = vmul.f32 %v1135, %v1160
  %v1162 = vpack.c.bf16 %v1157, %v1155
  %v1163 = vpack.c.bf16 %v1161, %v1159
  %v1164 = vld [vmem:[%s5] sm:$0xf]
  %v1165 = vld [vmem:[%s5 + $0x4] sm:$0xf]
  %v1166 = vld [vmem:[%s5 + $0x8] sm:$0xf]
  %v1167 = vld [vmem:[%s5 + $0xc] sm:$0xf]
  %v1168 = vld [vmem:[%s5 + $0x10] sm:$0xf]
  %v1169 = vld [vmem:[%s5 + $0x14] sm:$0xf]
  %v1170 = vld [vmem:[%s5 + $0x18] sm:$0xf]
  %v1171 = vld [vmem:[%s5 + $0x1c] sm:$0xf]
  %v1172 = vld [vmem:[%s6] sm:$0x1]
  %v1174 = vlaneseq
  %v1175 = vshrl.u32 %v1174, 7
  %v1176 = vsub.s32 0, %v1175
  %v1177 = vrot.slane %v1172, %v1176
  %v1187 = vunpack.c.l.b16 %v1164
  %v1188 = vunpack.c.l.b16 %v1165
  %v1189 = vunpack.c.l.b16 %v1166
  %v1190 = vunpack.c.l.b16 %v1167
  %v1191 = vunpack.c.l.b16 %v1168
  %v1192 = vunpack.c.l.b16 %v1169
  %v1193 = vunpack.c.l.b16 %v1170
  %v1194 = vunpack.c.l.b16 %v1171
  %v1195 = vpack.c.b16 %v1188, %v1187
  %v1196 = vpack.c.b16 %v1190, %v1189
  %v1197 = vpack.c.b16 %v1192, %v1191
  %v1198 = vpack.c.b16 %v1194, %v1193
  %vm1203 = vcmask 523264
  %v1205 = vsel %vm1203, %v1162, 0
  %v1208 = vsel %vm1203, %v1163, 0
  %1210 = vmatprep.subr.bf16.mxu0 0
  %1211 = vmatpush1.bf16.msra.mxu0 %v1195
  %1212 = vmatprep.subr.bf16.mxu0 0
  %1213 = vmatpush1.bf16.msra.mxu0 %v1196
  %1214 = vmatprep.subr.bf16.mxu0 0
  %1215 = vmatpush1.bf16.msra.mxu0 %v1197
  %1216 = vmatprep.subr.bf16.mxu0 0
  %1217 = vmatpush1.bf16.msra.mxu0 %v1198
  %1218 = vmatprep.subr.bf16.mxu0 0
  %1219 = vmatpush1.bf16.msra.mxu0 0
  %1220 = vmatprep.subr.bf16.mxu0 0
  %1221 = vmatpush1.bf16.msra.mxu0 0
  %1222 = vmatprep.subr.bf16.mxu0 0
  %1223 = vmatpush1.bf16.msra.mxu0 0
  %1224 = vmatprep.subr.bf16.mxu0 0
  %1225 = vmatpush1.bf16.msra.mxu0 0
  %1226 = vmatprep.subr.bf16.mxu0 0
  %1227 = vmatpush1.bf16.msra.mxu0 0
  %1228 = vmatprep.subr.bf16.mxu0 0
  %1229 = vmatpush1.bf16.msra.mxu0 0
  %1230 = vmatprep.subr.bf16.mxu0 0
  %1231 = vmatpush1.bf16.msra.mxu0 0
  %1232 = vmatprep.subr.bf16.mxu0 0
  %1233 = vmatpush1.bf16.msra.mxu0 0
  %1234 = vmatprep.subr.bf16.mxu0 0
  %1235 = vmatpush1.bf16.msra.mxu0 0
  %1236 = vmatprep.subr.bf16.mxu0 0
  %1237 = vmatpush1.bf16.msra.mxu0 0
  %1238 = vmatprep.subr.bf16.mxu0 0
  %1239 = vmatpush1.bf16.msra.mxu0 0
  %1240 = vmatprep.subr.bf16.mxu0 0
  %1241 = vmatpush1.bf16.msra.mxu0 0
  %1242 = vmatprep.mubr.bf16.mxu0 0
  %1243 = vmatmul.mubr.bf16.gmra.mrb[0].mxu0 %v1205
  %v1244 = vpop.f32.mrb[0].mxu0
  %v1245 = vadd.f32 %v1177, %v1244
  %v1246 = vpop.f32.mrb[0].mxu0
  %v1247 = vpop.f32.mrb[0].mxu0
  %v1248 = vadd.f32 %v1177, %v1247
  %v1249 = vpop.f32.mrb[0].mxu0
  %1250 = vmatprep.mubr.bf16.mxu0 0
  %1251 = vmatmul.mubr.bf16.gmra.mrb[0].mxu0 %v1208
  %v1252 = vpop.f32.mrb[0].mxu0
  %v1253 = vadd.f32 %v1177, %v1252
  %v1254 = vpop.f32.mrb[0].mxu0
  %v1255 = vpop.f32.mrb[0].mxu0
  %v1256 = vadd.f32 %v1177, %v1255
  %v1257 = vpop.f32.mrb[0].mxu0
  %1258 = vdwg.mxu0
  %1259 = vst [vmem:[%s7] sm:$0xff] %v1245
  %1260 = vst [vmem:[%s7 + $0x8] sm:$0xff] %v1248
  %1261 = vst [vmem:[%s7 + $0x10] sm:$0xff] %v1253
  %1262 = vst [vmem:[%s7 + $0x18] sm:$0xff] %v1256
  // Predicated region
  $region30: #{yolov12_no_concat_forward.1} parent=0 // pred_check
    _
  $region31: #{yolov12_no_concat_forward.1} parent=0 // pred_check_branch
    %1264 = sbr.rel (0) target = $region33
  $region32: #{yolov12_no_concat_forward.1} parent=0 // pred_region
    _
  $region33: #{yolov12_no_concat_forward.1} parent=0 // pred_fallthru
    _
  // Predicated region
  $region34: #{yolov12_no_concat_forward.1} parent=0 // pred_check
    _
  $region35: #{yolov12_no_concat_forward.1} parent=0 // pred_check_branch
    %1266 = sbr.rel (0) target = $region37
  $region36: #{yolov12_no_concat_forward.1} parent=0 // pred_region
    _
  $region37: #{yolov12_no_concat_forward.1} parent=0 // pred_fallthru
    _

</llo_original>
